<compile_context>
chip_gen: v5e
topology: v5e:2x2
jax: 0.10.0
libtpu: 0.0.40
codegen_flags: <defaults>
</compile_context>

<pallas_src>
import jax
import jax.numpy as jnp
from jax.experimental import pallas as pl
from jax.experimental.pallas import tpu as pltpu


def _hbm_copy_kernel(x_hbm, o_hbm, sem):
    # Pure copy: one full-buffer HBM->HBM DMA.  No VMEM round-trip, no
    # per-grid-step overhead, no tiling/layout concerns — the DMA engine
    # streams the (identically laid out) source buffer into the output.
    cp = pltpu.make_async_copy(x_hbm, o_hbm, sem)
    cp.start()
    cp.wait()


def reshape_forward(x, shape, *, materialize=True, donate=False):
    """Pallas equivalent of Reshape(shape).forward(x) == x.view(*shape).

    materialize=False  -> metadata-only view (recommended production path).
    donate=True        -> caller donates x; reshape semantics are aliasing, so
                          the "copy" is elided entirely (view path).
    otherwise          -> materializing HBM->HBM DMA copy via Pallas.
    """
    s0, s1, s2 = shape
    total = s0 * s1 * s2
    assert x.size == total, f"cannot view {x.shape} as {shape}"

    if not materialize or donate:
        # Reshape of a contiguous buffer is metadata-only in XLA: no HBM
        # traffic.  With a donated input an aliased materializing output
        # would be byte-identical to this view.
        # TODO(synk): if a Pallas-materialized *aliased* output is ever
        # required, add input_output_aliases={0: 0} to the pallas_call below
        # and drop the DMA (output buffer == donated input buffer).
        return jnp.reshape(x, (s0, s1, s2))

    itemsize = jnp.dtype(x.dtype).itemsize
    x3d = jnp.reshape(x, (s0, s1, s2))  # metadata-only relabel

    return pl.pallas_call(
        _hbm_copy_kernel,
        out_shape=jax.ShapeDtypeStruct((s0, s1, s2), x.dtype),
        # Raw HBM refs on both sides: Pallas does no automatic tiling/DMA,
        # the kernel issues the single streaming copy itself.
        in_specs=[pl.BlockSpec(memory_space=pl.ANY)],
        out_specs=pl.BlockSpec(memory_space=pl.ANY),
        scratch_shapes=[pltpu.SemaphoreType.DMA],
        # Purely memory-bound custom call: tell XLA's scheduler the truth so
        # it overlaps this correctly when embedded in a larger jit.
        cost_estimate=pl.CostEstimate(
            flops=0, transcendentals=0, bytes_accessed=2 * total * itemsize),
    )(x3d)


if __name__ == "__main__":
    key = jax.random.PRNGKey(0)
    k0, k1, k2 = jax.random.split(key, 3)

    # Case 1: NCHW-like input viewed as (B, C, H*W) — main DMA copy path.
    B, C, H, W = 2, 4, 16, 16
    x = jax.random.normal(k0, (B, C, H, W), dtype=jnp.float32)
    target = (B, C, H * W)
    out = jax.block_until_ready(reshape_forward(x, target))
    ref = jnp.reshape(x, target)
    assert out.shape == target
    assert out.dtype == x.dtype
    assert bool(jnp.array_equal(out, ref))

    # Case 2: element count not a multiple of 128 — same DMA path, no ragged
    # fallback / masked-store penalty since nothing goes through VMEM.
    x2 = jax.random.normal(k1, (2, 3, 5, 7), dtype=jnp.float32)
    target2 = (2, 3, 35)
    out2 = jax.block_until_ready(reshape_forward(x2, target2))
    assert out2.shape == target2
    assert bool(jnp.array_equal(out2, jnp.reshape(x2, target2)))

    # Case 3: narrow dtype (bf16) — DMA path is dtype/packing agnostic.
    x3 = jax.random.normal(k2, (B, C, H, W), dtype=jnp.bfloat16)
    out3 = jax.block_until_ready(reshape_forward(x3, target))
    assert out3.dtype == jnp.bfloat16
    assert bool(jnp.array_equal(out3, jnp.reshape(x3, target)))

    # Case 4: zero-cost view / donated-input paths.
    out4 = jax.block_until_ready(reshape_forward(x, target, materialize=False))
    assert bool(jnp.array_equal(out4, ref))
    out5 = jax.block_until_ready(reshape_forward(x, target, donate=True))
    assert bool(jnp.array_equal(out5, ref))

    print("KERNEL_OK")
</pallas_src>

<mosaic_0001>
module attributes {stable_mosaic.version = 11 : i64} {
  func.func @_hbm_copy_kernel(%arg0: memref<2x4x256xf32, #tpu.memory_space<any>>, %arg1: memref<2x4x256xf32, #tpu.memory_space<any>>, %arg2: memref<!tpu.dma_semaphore, #tpu.memory_space<semaphore_mem>>) attributes {dimension_semantics = [], scalar_prefetch = 0 : i64, scratch_operands = 1 : i64, tpu.core_type = #tpu.core_type<tc>} {
    tpu.enqueue_dma source(%arg0 : memref<2x4x256xf32, #tpu.memory_space<any>>) target(%arg1 : memref<2x4x256xf32, #tpu.memory_space<any>>) target_semaphore(%arg2 : memref<!tpu.dma_semaphore, #tpu.memory_space<semaphore_mem>>)
    tpu.wait_dma2 semaphore(%arg2 : memref<!tpu.dma_semaphore, #tpu.memory_space<semaphore_mem>>) src(%arg0 : memref<2x4x256xf32, #tpu.memory_space<any>>) dst(%arg1 : memref<2x4x256xf32, #tpu.memory_space<any>>)
    return
  }
}

</mosaic_0001>

<llo_original>
// kernel: tpu_custom_call.1
$region0: #{tpu_custom_call.1}
  #allocation0 [shape = 'u32[]', space=smem, size = 0x4, offset = 0x4, fixed_abs, tag = 'smem constant byte address 0x4 - core index']
  #allocation1 [shape = 'u32[72,128]{1,0:T(1,128)}', space=vmem, size = 0x9000, scoped, tag = 'internal scratch']
  #allocation2 [shape = 's32[1]{0}', space=sflag, size = 0x4, scoped, tag = 'scratch operand']
  #allocation3 [shape = 's32[]', space=sflag, size = 0x4, offset = 0, fixed_abs, tag = 'sflag constant byte address 0x0 - dummy sync flag']
  #allocation4 [shape = 'u32[0]{0}', space=smem, size = 0, offset = 0, fixed_abs, tag = 'smem constant byte address 0x0 - null']
  %s0 = inlined_call_operand.hbm [shape: f32[2,4,256], index: 0, kind: input, shape index: {}]
  %s1 = inlined_call_operand.hbm [shape: f32[2,4,256], index: 1, kind: output, shape index: {}]
  %s2 = sld [smem:[#allocation0]]
  $region2: #{tpu_custom_call.1} parent=0
    _
  %s4 = ssub.s32 1, %s2
  %s5 = scalar_select 0, %s4, %s2
  %s7 = sshll.u32 1, 14
  %s8 = sxor.u32 4294967295, %s7
  %s10 = sshll.u32 %s0, 4
  %s11 = int_to_ptr.hbm [resolvable:$true] %s10
  %s12 = sshll.u32 %s1, 4
  %s13 = int_to_ptr.hbm [resolvable:$true] %s12
  %16 = dma.general %s11, 256, %s13, [#allocation2], [#allocation3], [#allocation4], 0, 0
  %s17 = smul.u32 4, 2
  %s18 = smul.u32 %s17, 1
  %s19 = smul.u32 %s18, 2
  %s20 = sshll.u32 %s19, 4
  %21 = dma.done [#allocation2], %s20
  %22 = vsyncmov [#allocation2]
  %s23 = vpop.sfrf %22
  %p24 = scmp.eq.s32.totalorder %s23, 0
  %p25 = pneg %p24
  %27 = shalt.err (%p25)

</llo_original>
